<compile_context>
chip_gen: v7x
topology: tpu7x:2x2x1
jax: 0.10.0
libtpu: 0.0.40
codegen_flags: <defaults>
</compile_context>

<pallas_src>
import numpy as np
import jax
import jax.numpy as jnp
from jax import lax
from jax.experimental import pallas as pl
from jax.experimental.pallas import tpu as pltpu


def _round_up(v, m):
    return (v + m - 1) // m * m


def _pick_batch_block(n, h, w, itemsize=4, budget_bytes=1 << 20):
    """Images per grid step: amortize per-step overhead, keep >= 2 grid steps."""
    per_img = _round_up(h, 8) * _round_up(w, 128) * itemsize
    best = 1
    for nb in range(1, n + 1):
        if n % nb:
            continue
        if nb * per_img > budget_bytes:
            break
        if n // nb >= min(2, n):
            best = nb
    return best


def _make_stencil_kernel(weight_groups, Ho, Wo):
    """weight_groups: list of (weight, [(ki, kj), ...]) compile-time constants.

    Loads the (nb, H, W) tile once, forms each tap operand as a static
    (nb, Ho, Wo) slice (ki -> sublane shift, kj -> lane shift), pre-adds
    operands that share a weight, then accumulates weight * group_sum.
    """

    def kernel(x_ref, o_ref):
        if not weight_groups:            # degenerate all-zero filter
            o_ref[...] = jnp.zeros_like(o_ref)
            return
        x = x_ref[...]                   # (nb, H, W) f32, loaded once
        acc = None
        for w, taps in weight_groups:
            ki, kj = taps[0]
            g = x[:, ki:ki + Ho, kj:kj + Wo]
            for ki, kj in taps[1:]:
                g = g + x[:, ki:ki + Ho, kj:kj + Wo]
            term = g * w                 # one multiply per distinct weight
            acc = term if acc is None else acc + term
        o_ref[...] = acc.astype(o_ref.dtype)

    return kernel


def conv2d_derivative(x_nchw, der_filter, deno):
    """x_nchw: (N, 1, H, W) f32; der_filter: (1, 1, K, K) constants; deno: float."""
    N, C, H, W = x_nchw.shape
    assert C == 1, "Conv2dDerivative is fixed to 1 input / 1 output channel"

    filt = np.asarray(der_filter, dtype=np.float32)
    Kh, Kw = filt.shape[-2], filt.shape[-1]
    filt = filt.reshape(Kh, Kw)
    Ho, Wo = H - Kh + 1, W - Kw + 1
    assert Ho >= 1 and Wo >= 1

    # Fold the scalar divide into trace-time constant weights and group taps
    # that share a weight.  Zero test is on the *raw* filter entry so the fold
    # can never silently drop a (tiny) nonzero tap.
    groups = {}
    for ki in range(Kh):
        for kj in range(Kw):
            raw = float(filt[ki, kj])
            if raw == 0.0:
                continue
            w = raw / float(deno)
            groups.setdefault(w, []).append((ki, kj))
    weight_groups = list(groups.items())

    # Free (metadata-only) reshape: NCHW with C == 1 -> (N, H, W). No transpose.
    x3 = x_nchw.reshape(N, H, W).astype(jnp.float32)

    nb = _pick_batch_block(N, H, W)
    n_steps = N // nb

    # Explicit VMEM budget: double-buffered in/out blocks + live temporaries,
    # clamped to the v7x per-TC physical VMEM.
    in_blk = nb * _round_up(H, 8) * _round_up(W, 128) * 4
    out_blk = nb * _round_up(Ho, 8) * _round_up(Wo, 128) * 4
    need = 3 * in_blk + 2 * out_blk + 8 * out_blk
    vmem_limit = int(min(64 * 1024 * 1024, max(need, 32 * 1024 * 1024)))

    kernel = _make_stencil_kernel(weight_groups, Ho, Wo)

    out = pl.pallas_call(
        kernel,
        out_shape=jax.ShapeDtypeStruct((N, Ho, Wo), jnp.float32),
        grid=(n_steps,),
        in_specs=[pl.BlockSpec((nb, H, W), lambda n: (n, 0, 0))],
        out_specs=pl.BlockSpec((nb, Ho, Wo), lambda n: (n, 0, 0)),
        compiler_params=pltpu.CompilerParams(
            dimension_semantics=("parallel",),
            vmem_limit_bytes=vmem_limit),
    )(x3)

    # Free reshape back to PyTorch NCHW: (N, Ho, Wo) -> (N, 1, Ho, Wo).
    return out.reshape(N, 1, Ho, Wo)


if __name__ == "__main__":
    # Deterministic parameters: the classic PeRCNN 4th-order Laplace stencil.
    lap_2d = np.array(
        [[0.0,       0.0,      -1.0 / 12, 0.0,      0.0],
         [0.0,       0.0,       4.0 / 3,  0.0,      0.0],
         [-1.0 / 12, 4.0 / 3,  -5.0,      4.0 / 3, -1.0 / 12],
         [0.0,       0.0,       4.0 / 3,  0.0,      0.0],
         [0.0,       0.0,      -1.0 / 12, 0.0,      0.0]], dtype=np.float32)
    der_filter = lap_2d.reshape(1, 1, 5, 5)               # nn.Conv2d weight shape
    dx = 1.0 / 16.0
    deno = dx * dx                                         # e.g. c*dx^2

    # Small deterministic input, NCHW with 1 channel (module fixes in_ch=1).
    key = jax.random.PRNGKey(0)
    x = jax.random.normal(key, (2, 1, 16, 16), dtype=jnp.float32)

    y = conv2d_derivative(x, der_filter, deno)
    y = jax.block_until_ready(y)

    # Reference: XLA VALID cross-correlation (== PyTorch Conv2d, no bias) / deno.
    y_ref = lax.conv_general_dilated(
        x, jnp.asarray(der_filter), window_strides=(1, 1), padding="VALID",
        dimension_numbers=("NCHW", "OIHW", "NCHW")) / deno

    assert y.shape == (2, 1, 12, 12)
    assert jnp.allclose(y, y_ref, atol=1e-4, rtol=1e-4)

    print("KERNEL_OK")
</pallas_src>

<mosaic_0001>
module attributes {stable_mosaic.version = 11 : i64} {
  func.func @kernel(%arg0: i32, %arg1: memref<1x16x16xf32, #tpu.memory_space<vmem>>, %arg2: memref<1x12x12xf32, #tpu.memory_space<vmem>>) attributes {dimension_semantics = [#tpu.dimension_semantics<parallel>], iteration_bounds = array<i64: 2>, scalar_prefetch = 0 : i64, scratch_operands = 0 : i64, tpu.core_type = #tpu.core_type<tc>, window_params = [{transform_indices = @transform_0, window_bounds = array<i64: 1, 16, 16>}, {transform_indices = @transform_1, window_bounds = array<i64: 1, 12, 12>}]} {
    %c0 = arith.constant 0 : index
    %c0_0 = arith.constant 0 : index
    %c0_1 = arith.constant 0 : index
    %0 = vector.load %arg1[%c0, %c0_0, %c0_1] : memref<1x16x16xf32, #tpu.memory_space<vmem>>, vector<1x16x16xf32>
    %1 = vector.extract_strided_slice %0 {offsets = [0, 0, 2], sizes = [1, 12, 12], strides = [1, 1, 1]} : vector<1x16x16xf32> to vector<1x12x12xf32>
    %2 = vector.extract_strided_slice %0 {offsets = [0, 2, 0], sizes = [1, 12, 12], strides = [1, 1, 1]} : vector<1x16x16xf32> to vector<1x12x12xf32>
    %3 = arith.addf %1, %2 : vector<1x12x12xf32>
    %4 = vector.extract_strided_slice %0 {offsets = [0, 2, 4], sizes = [1, 12, 12], strides = [1, 1, 1]} : vector<1x16x16xf32> to vector<1x12x12xf32>
    %5 = arith.addf %3, %4 : vector<1x12x12xf32>
    %6 = vector.extract_strided_slice %0 {offsets = [0, 4, 2], sizes = [1, 12, 12], strides = [1, 1, 1]} : vector<1x16x16xf32> to vector<1x12x12xf32>
    %7 = arith.addf %5, %6 : vector<1x12x12xf32>
    %cst = arith.constant -21.333334 : f32
    %8 = vector.broadcast %cst : f32 to vector<1x12x12xf32>
    %9 = arith.mulf %7, %8 : vector<1x12x12xf32>
    %10 = vector.extract_strided_slice %0 {offsets = [0, 1, 2], sizes = [1, 12, 12], strides = [1, 1, 1]} : vector<1x16x16xf32> to vector<1x12x12xf32>
    %11 = vector.extract_strided_slice %0 {offsets = [0, 2, 1], sizes = [1, 12, 12], strides = [1, 1, 1]} : vector<1x16x16xf32> to vector<1x12x12xf32>
    %12 = arith.addf %10, %11 : vector<1x12x12xf32>
    %13 = vector.extract_strided_slice %0 {offsets = [0, 2, 3], sizes = [1, 12, 12], strides = [1, 1, 1]} : vector<1x16x16xf32> to vector<1x12x12xf32>
    %14 = arith.addf %12, %13 : vector<1x12x12xf32>
    %15 = vector.extract_strided_slice %0 {offsets = [0, 3, 2], sizes = [1, 12, 12], strides = [1, 1, 1]} : vector<1x16x16xf32> to vector<1x12x12xf32>
    %16 = arith.addf %14, %15 : vector<1x12x12xf32>
    %cst_2 = arith.constant 341.333344 : f32
    %17 = vector.broadcast %cst_2 : f32 to vector<1x12x12xf32>
    %18 = arith.mulf %16, %17 : vector<1x12x12xf32>
    %19 = arith.addf %9, %18 : vector<1x12x12xf32>
    %20 = vector.extract_strided_slice %0 {offsets = [0, 2, 2], sizes = [1, 12, 12], strides = [1, 1, 1]} : vector<1x16x16xf32> to vector<1x12x12xf32>
    %cst_3 = arith.constant -1.280000e+03 : f32
    %21 = vector.broadcast %cst_3 : f32 to vector<1x12x12xf32>
    %22 = arith.mulf %20, %21 : vector<1x12x12xf32>
    %23 = arith.addf %19, %22 : vector<1x12x12xf32>
    %c0_4 = arith.constant 0 : index
    %c0_5 = arith.constant 0 : index
    %c0_6 = arith.constant 0 : index
    %24 = vector.load %arg2[%c0_4, %c0_5, %c0_6] : memref<1x12x12xf32, #tpu.memory_space<vmem>>, vector<1x12x12xf32>
    tpu.vector_store %arg2[%c0_4, %c0_5, %c0_6], %23 {strides = array<i32>} : memref<1x12x12xf32, #tpu.memory_space<vmem>>, vector<1x12x12xf32>,
    return
  }
  func.func @transform_0(%arg0: i32) -> (i32, i32, i32) {
    %c0_i32 = arith.constant 0 : i32
    %c0_i32_0 = arith.constant 0 : i32
    %c0_i32_1 = arith.constant 0 : i32
    return %arg0, %c0_i32, %c0_i32_0 : i32, i32, i32
  }
  func.func @transform_1(%arg0: i32) -> (i32, i32, i32) {
    %c0_i32 = arith.constant 0 : i32
    %c0_i32_0 = arith.constant 0 : i32
    %c0_i32_1 = arith.constant 0 : i32
    return %arg0, %c0_i32, %c0_i32_0 : i32, i32, i32
  }
}

</mosaic_0001>

<llo_original>
// kernel: tpu_custom_call.1
$region0: #{tpu_custom_call.1}
  #allocation0 [shape = 'u32[]', space=smem, size = 0x4, offset = 0x4, fixed_abs, tag = 'smem constant byte address 0x4 - core index']
  #allocation1 [shape = 'u32[144,128]{1,0:T(1,128)}', space=vmem, size = 0x12000, scoped, tag = 'internal scratch']
  %s0 = inlined_call_operand.hbm [shape: f32[2,16,16], index: 0, kind: input, shape index: {}]
  %s1 = inlined_call_operand.vmem [shape: f32[2,12,12], index: 1, kind: output, shape index: {}]
  %s2 = sld [smem:[#allocation0]]
  $region41: #{tpu_custom_call.1} parent=0
    _
  %s4 = ssub.s32 1, %s2
  %s5 = scalar_select 0, %s4, %s2
  $region1: #{tpu_custom_call.1} parent=0
    #allocation2 [shape = 'u8[16384]{0}', space=vmem, size = 0x4000, scoped, tag = 'input window, operand 0']
    #allocation3 [shape = 's32[2]{0}', space=sflag, size = 0x8, scoped, tag = 'scoped memory for tpu_custom_call.1']
    %6 = vsyncpa [#allocation3], 0
    %s7 = scalar_lea.sflag [#allocation3], 1
    %8 = vsyncpa %s7, 0
    loop: start=0, step=1, limit=4
    $region2: #{tpu_custom_call.1} parent=1 // loop_pre_header
      _
    $region3: #{tpu_custom_call.1} parent=1 // loop_header
      %s10 = sphi 0, %s14
      %p11 = scmp.ge.s32.totalorder %s10, 4
      %s20 = sphi 0, %s22
      %s23 = sphi 0, %s20
      %s24 = sphi 0, %s23
      %s40 = sphi 0, %s24
      %s46 = sphi 0, %s48
      %s49 = sphi 0, %s46
      %s50 = sphi 0, %s49
      %s66 = sphi 0, %s50
    $region4: #{tpu_custom_call.1} parent=1 // loop_header_branch
      %13 = sbr.rel (%p11) target = $region8
    $region5: #{tpu_custom_call.1} parent=1 // loop_body
      %s15 = ssub.s32 %s10, 1
      %s16 = ssub.s32 %s10, 2
      %s17 = sadd.s32 %s10, 1
      %s18 = ssub.s32 %s10, %s17
      %p19 = scmp.eq.s32.totalorder %s18, 0
      %s21 = sadd.s32 %s20, 1
      %s22 = scalar_select %p19, %s20, %s21
      %p25 = pneg %p19
      %p26 = scmp.eq.s32.totalorder %s10, 1
      %p27 = por %p25, %p26
      %p28 = scmp.ne.s32.totalorder %s20, %s23
      %p29 = scmp.eq.s32.totalorder %s10, 0
      %p30 = por %p28, %p29
      %p31 = scmp.ne.s32.totalorder %s20, %s23
      %p32 = scmp.eq.s32.totalorder %s15, 1
      %p33 = por %p31, %p32
      %p34 = scmp.ne.s32.totalorder %s23, %s24
      %p35 = scmp.eq.s32.totalorder %s15, 0
      %p36 = por %p34, %p35
      %p37 = scmp.ne.s32.totalorder %s23, %s24
      %p38 = scmp.eq.s32.totalorder %s16, 1
      %p39 = por %p37, %p38
      %p41 = scmp.ne.s32.totalorder %s24, %s40
      %p42 = scmp.eq.s32.totalorder %s16, 0
      %p43 = por %p41, %p42
      %s44 = ssub.s32 %s10, %s17
      %p45 = scmp.eq.s32.totalorder %s44, 0
      %s47 = sadd.s32 %s46, 1
      %s48 = scalar_select %p45, %s46, %s47
      %p51 = pneg %p45
      %p52 = scmp.eq.s32.totalorder %s10, 1
      %p53 = por %p51, %p52
      %p54 = scmp.ne.s32.totalorder %s46, %s49
      %p55 = scmp.eq.s32.totalorder %s10, 0
      %p56 = por %p54, %p55
      %p57 = scmp.ne.s32.totalorder %s46, %s49
      %p58 = scmp.eq.s32.totalorder %s15, 1
      %p59 = por %p57, %p58
      %p60 = scmp.ne.s32.totalorder %s49, %s50
      %p61 = scmp.eq.s32.totalorder %s15, 0
      %p62 = por %p60, %p61
      %p63 = scmp.ne.s32.totalorder %s49, %s50
      %p64 = scmp.eq.s32.totalorder %s16, 1
      %p65 = por %p63, %p64
      %p67 = scmp.ne.s32.totalorder %s50, %s66
      %p68 = scmp.eq.s32.totalorder %s16, 0
      %p69 = por %p67, %p68
      %p70 = scmp.le.s32.totalorder 1, %s10
      %p71 = scmp.lt.s32.totalorder %s10, 3
      %p72 = pnand %p70, %p71
      %p73 = pneg %p72
      // Predicated region
      $region9: #{tpu_custom_call.1} parent=5 // pred_check
        _
      $region10: #{tpu_custom_call.1} parent=5 // pred_check_branch
        %75 = sbr.rel (%p72) target = $region12
      $region11: #{tpu_custom_call.1} parent=5 // pred_region
        %s76 = ssub.s32 %s10, 1
      $region12: #{tpu_custom_call.1} parent=5 // pred_fallthru
        _
      %p77 = scmp.lt.s32.totalorder %s10, 2
      // Predicated region
      $region13: #{tpu_custom_call.1} parent=5 // pred_check
        %p78 = pneg %p77
      $region14: #{tpu_custom_call.1} parent=5 // pred_check_branch
        %80 = sbr.rel (%p78) target = $region16
      $region15: #{tpu_custom_call.1} parent=5 // pred_region
        // Predicated region
        $region17: #{tpu_custom_call.1} parent=15 // pred_check
          %p81 = pneg %p30
        $region18: #{tpu_custom_call.1} parent=15 // pred_check_branch
          %83 = sbr.rel (%p81) target = $region20
        $region19: #{tpu_custom_call.1} parent=15 // pred_region
          %s84 = sand.u32 %s20, 1
          %s85 = scalar_lea.sflag [#allocation3], %s84
          %s86 = sand.u32 %s20, 1
          %s87 = smul.addr %s86, 16
          %s88 = scalar_lea.vmem [#allocation2], %s87
          %s90 = ssub.s32 256, 256
          %91 = vsyncadd %s85, %s90
          %s92 = smul.addr %s10, 2
          %s93 = smul.addr %s92, 128
          %s94 = scalar_lea.hbm %s0, %s93
          %s95 = sshll.u32 %s88, 4
          %s96 = int_to_ptr.vmem [resolvable:$true] %s95
          %101 = dma.hbm_to_vmem [thread:$0]  %s94, 256, %s96, %s85, 128, 128, 8
        $region20: #{tpu_custom_call.1} parent=15 // pred_fallthru
          _
      $region16: #{tpu_custom_call.1} parent=5 // pred_fallthru
        _
      %p102 = scmp.le.s32.totalorder 1, %s10
      %p103 = scmp.lt.s32.totalorder %s10, 3
      %p104 = pnand %p102, %p103
      %p105 = pneg %p104
      // Predicated region
      $region21: #{tpu_custom_call.1} parent=5 // pred_check
        _
      $region22: #{tpu_custom_call.1} parent=5 // pred_check_branch
        %107 = sbr.rel (%p104) target = $region24
      $region23: #{tpu_custom_call.1} parent=5 // pred_region
        %s108 = ssub.s32 %s10, 1
        %s109 = sand.u32 %s23, 1
        %s110 = scalar_lea.sflag [#allocation3], %s109
        %s111 = sand.u32 %s23, 1
        %s112 = smul.addr %s111, 16
        %s113 = scalar_lea.vmem [#allocation2], %s112
        // Predicated region
        $region25: #{tpu_custom_call.1} parent=23 // pred_check
          %p114 = pneg %p36
        $region26: #{tpu_custom_call.1} parent=23 // pred_check_branch
          %116 = sbr.rel (%p114) target = $region28
        $region27: #{tpu_custom_call.1} parent=23 // pred_region
          %117 = dma.done %s110, 256
        $region28: #{tpu_custom_call.1} parent=23 // pred_fallthru
          _
        %s118 = sand.u32 %s23, 1
        %s119 = scalar_lea.sflag [#allocation3], %s118
        %s120 = sand.u32 %s23, 1
        %s121 = smul.addr %s120, 16
        %s122 = scalar_lea.vmem [#allocation2], %s121
        %p123 = pneg %p36
        %p124 = pneg %p33
        %p125 = pneg %p62
        %p126 = pneg %p59
        %p127 = scmp.lt.s32.totalorder %s15, 1
        %s128 = scalar_select %p127, %s15, 1
        %s129 = smul.addr %s128, 2
        %s130 = smul.addr %s129, 8
        %s131 = scalar_lea.vmem %s1, %s130
        %p132 = scmp.lt.s32.totalorder %s15, 1
        %s133 = scalar_select %p132, %s15, 1
        %s134 = smul.addr %s133, 2
        %s135 = smul.addr %s134, 8
        %s136 = scalar_lea.vmem %s1, %s135
        %v137 = vld [vmem:[%s113] sm:$0xff]
        %v138 = vld [vmem:[%s113 + $0x8] sm:$0xff]
        %vm141 = vcmask 1045504
        %v142 = vrot.slane %v137, 2
        %v143 = vrot.slane %v138, 2
        %v144 = vsel %vm141, %v142, %v143
        %145 = vrot.lane.b32.xlu0 %v144, 2
        %v146 = vpop.permute.xlu0 %145
        %147 = vrot.lane.b32.xlu0 %v143, 2
        %v148 = vpop.permute.xlu0 %147
        %v151 = vadd.f32 %v137, %v146
        %v152 = vadd.f32 %v138, %v148
        %153 = vrot.lane.b32.xlu0 %v144, 126
        %v154 = vpop.permute.xlu0 %153
        %155 = vrot.lane.b32.xlu0 %v143, 126
        %v156 = vpop.permute.xlu0 %155
        %v159 = vadd.f32 %v151, %v154
        %v160 = vadd.f32 %v152, %v156
        %vm161 = vcmask 1043456
        %v162 = vrot.slane %v137, 4
        %v163 = vrot.slane %v138, 4
        %v164 = vsel %vm161, %v162, %v163
        %v167 = vadd.f32 %v159, %v164
        %v168 = vadd.f32 %v160, %v163
        %v169 = vmul.f32 %v167, -21.333334
        %v170 = vmul.f32 %v168, -21.333334
        %vm171 = vcmask 1046528
        %v172 = vrot.slane %v137, 1
        %v173 = vrot.slane %v138, 1
        %v174 = vsel %vm171, %v172, %v173
        %175 = vrot.lane.b32.xlu0 %v174, 1
        %v176 = vpop.permute.xlu0 %175
        %177 = vrot.lane.b32.xlu0 %v173, 1
        %v178 = vpop.permute.xlu0 %177
        %v181 = vadd.f32 %v137, %v176
        %v182 = vadd.f32 %v138, %v178
        %183 = vrot.lane.b32.xlu0 %v174, 127
        %v184 = vpop.permute.xlu0 %183
        %185 = vrot.lane.b32.xlu0 %v173, 127
        %v186 = vpop.permute.xlu0 %185
        %v189 = vadd.f32 %v181, %v184
        %v190 = vadd.f32 %v182, %v186
        %v193 = vadd.f32 %v189, %v144
        %v194 = vadd.f32 %v190, %v143
        %v195 = vmul.f32 %v193, 341.33334
        %v196 = vmul.f32 %v194, 341.33334
        %v199 = vrot.slane %v195, 1
        %v200 = vrot.slane %v196, 1
        %v201 = vsel %vm171, %v199, %v200
        %v204 = vadd.f32 %v169, %v201
        %v205 = vadd.f32 %v170, %v200
        %v206 = vmul.f32 %v137, -1280.0
        %v207 = vmul.f32 %v138, -1280.0
        %v210 = vrot.slane %v206, 2
        %v211 = vrot.slane %v207, 2
        %v212 = vsel %vm141, %v210, %v211
        %v215 = vadd.f32 %v204, %v212
        %v216 = vadd.f32 %v205, %v211
        %219 = vrot.lane.b32.xlu0 %v215, 126
        %v220 = vpop.permute.xlu0 %219
        %221 = vrot.lane.b32.xlu0 %v216, 126
        %v222 = vpop.permute.xlu0 %221
        %vm225 = vcmask 97280
        %226 = vst.msk [vmem:[%s136] sm:$0xff] %vm225, %v220
        %vm227 = vcmask 93184
        %228 = vst.msk [vmem:[%s136 + $0x8] sm:$0xf] %vm227, %v222
        %p229 = scmp.lt.s32.totalorder %s15, 1
        %s230 = scalar_select %p229, %s15, 1
        %s231 = smul.addr %s230, 2
        %s232 = smul.addr %s231, 8
        %s233 = scalar_lea.vmem %s1, %s232
        // Predicated region
        $region29: #{tpu_custom_call.1} parent=23 // pred_check
          %p234 = pneg %p59
        $region30: #{tpu_custom_call.1} parent=23 // pred_check_branch
          %236 = sbr.rel (%p234) target = $region32
        $region31: #{tpu_custom_call.1} parent=23 // pred_region
          _
        $region32: #{tpu_custom_call.1} parent=23 // pred_fallthru
          _
      $region24: #{tpu_custom_call.1} parent=5 // pred_fallthru
        _
      %p237 = scmp.le.s32.totalorder 2, %s10
      // Predicated region
      $region33: #{tpu_custom_call.1} parent=5 // pred_check
        %p238 = pneg %p237
      $region34: #{tpu_custom_call.1} parent=5 // pred_check_branch
        %240 = sbr.rel (%p238) target = $region36
      $region35: #{tpu_custom_call.1} parent=5 // pred_region
        %s241 = ssub.s32 %s10, 2
        // Predicated region
        $region37: #{tpu_custom_call.1} parent=35 // pred_check
          %p242 = pneg %p65
        $region38: #{tpu_custom_call.1} parent=35 // pred_check_branch
          %244 = sbr.rel (%p242) target = $region40
        $region39: #{tpu_custom_call.1} parent=35 // pred_region
          %p245 = scmp.lt.s32.totalorder %s16, 1
          %s246 = scalar_select %p245, %s16, 1
          %s247 = smul.addr %s246, 2
          %s248 = smul.addr %s247, 8
          %s249 = scalar_lea.vmem %s1, %s248
        $region40: #{tpu_custom_call.1} parent=35 // pred_fallthru
          _
      $region36: #{tpu_custom_call.1} parent=5 // pred_fallthru
        _
    $region6: #{tpu_custom_call.1} parent=1 // loop_footer
      %s14 = sadd.s32 1, %s10
    $region7: #{tpu_custom_call.1} parent=1 // loop_footer_branch
      %9 = sbr.rel target = $region3
    $region8: #{tpu_custom_call.1} parent=1 // loop_exit
      _
    %250 = vsyncpa [#allocation3], 1
    %s251 = scalar_lea.sflag [#allocation3], 1
    %252 = vsyncpa %s251, 1

</llo_original>
